<compile_context>
chip_gen: v6e
topology: v6e:2x2x1
jax: 0.10.0
libtpu: 0.0.40
codegen_flags: <defaults>
</compile_context>

<pallas_src>
import jax
import jax.numpy as jnp
from jax.experimental import pallas as pl
from jax.experimental.pallas import tpu as pltpu


def fusion_classifier_kernel(ids_ref, h_ref, wfc_ref, bfc_ref, wout_ref,
                             bout_ref, o_ref):
    # ids_ref : (Bb, S) int32       h_ref   : (Bb, S, H) native dtype
    # wfc_ref : (5H, 2H) f32        bfc_ref : (1, 2H) f32
    # wout_ref: (2H, C) f32         bout_ref: (1, C) f32
    # o_ref   : (Bb, C) f32
    ids = ids_ref[...]
    h = h_ref[...].astype(jnp.float32)
    bb, seq = ids.shape
    hidden = h.shape[-1]

    # --- get_mask(input_ids) -------------------------------------------------
    pad = ids == 0
    cls = ids == 1
    sep = ids == 2
    content = jnp.logical_not(pad | cls | sep)
    # torch.cumsum(sep_mask, 1).bool()  ==  (position >= first SEP position)
    pos = jax.lax.broadcasted_iota(jnp.int32, (bb, seq), 1)
    first_sep = jnp.min(jnp.where(sep, pos, seq), axis=-1, keepdims=True)
    after_sep = pos >= first_sep
    b_m = content & after_sep
    a_m = content & jnp.logical_not(after_sep)          # content ^ b_mask

    # --- masked max-pools over the sequence axis -----------------------------
    pad_f = pad.astype(jnp.float32)[:, :, None]          # (Bb, S, 1)
    a_f = a_m.astype(jnp.float32)[:, :, None]
    b_f = b_m.astype(jnp.float32)[:, :, None]

    hp = h * pad_f                                        # hidden_states * pad_mask
    last_h = jnp.max(hp, axis=1)                          # (Bb, H)
    a_h = jnp.max(hp * a_f, axis=1)
    b_h = jnp.max(hp * b_f, axis=1)
    a_sub_b = jnp.abs(a_h - b_h)
    a_mul_b = a_h * b_h

    # --- fusion + MLP head ---------------------------------------------------
    # concat([last, a, b, |a-b|, a*b]) @ W_fc.T is computed with five static
    # (H, 2H) weight slices (avoids an in-kernel concatenate).
    # TODO(synk): nn.Dropout(p=0.5) is identity in eval mode; training-mode
    # stochastic dropout is not implemented here.
    parts = (last_h, a_h, b_h, a_sub_b, a_mul_b)
    z = bfc_ref[...].astype(jnp.float32)                  # (1, 2H), broadcasts
    for k, part in enumerate(parts):
        z = z + jnp.dot(part, wfc_ref[k * hidden:(k + 1) * hidden, :],
                        preferred_element_type=jnp.float32)
    z = jnp.maximum(z, 0.0)                               # relu, (Bb, 2H)
    logits = (jnp.dot(z, wout_ref[...], preferred_element_type=jnp.float32)
              + bout_ref[...])
    o_ref[...] = logits.astype(o_ref.dtype)


def _choose_block_b(batch, seq, hidden, itemsize, vmem_budget=24 << 20):
    """Largest batch block that keeps a double-buffered (Bb,S,H) tile (plus its
    f32 in-kernel copy) under the VMEM budget, divides the batch, and is
    sublane friendly (multiple of 8 unless it's the whole batch).  Prefers
    >= 2 grid steps so the 'parallel' batch axis can split across TensorCores."""
    per_row = seq * hidden * (2 * itemsize + 4)
    cap = max(1, vmem_budget // max(per_row, 1))
    candidates = [bb for bb in range(1, batch + 1)
                  if batch % bb == 0 and bb <= cap
                  and (bb % 8 == 0 or bb == batch)]
    if not candidates:
        return batch
    multi_step = [bb for bb in candidates if batch // bb >= 2]
    return max(multi_step) if multi_step else max(candidates)


def fusion_classifier_forward(hidden_states, input_ids, w_fc, b_fc, w_out,
                              b_out, *, block_b=None,
                              vmem_limit_bytes=48 << 20):
    """hidden_states: (B, S, H)   input_ids: (B, S) int
       w_fc: (2H, 5H)  b_fc: (2H,)   w_out: (C, 2H)  b_out: (C,)
       returns logits: (B, C) float32."""
    B, S, H = hidden_states.shape
    C = w_out.shape[0]
    assert w_fc.shape == (2 * H, 5 * H)
    assert w_out.shape == (C, 2 * H)

    ids = input_ids.astype(jnp.int32)
    w_fc_t = jnp.transpose(w_fc).astype(jnp.float32)      # (5H, 2H) lane-dense
    w_out_t = jnp.transpose(w_out).astype(jnp.float32)    # (2H, C)
    b_fc_row = b_fc.reshape(1, 2 * H).astype(jnp.float32)
    b_out_row = b_out.reshape(1, C).astype(jnp.float32)

    if block_b is None:
        block_b = _choose_block_b(B, S, H, hidden_states.dtype.itemsize)
    assert B % block_b == 0
    grid = (B // block_b,)

    out = pl.pallas_call(
        fusion_classifier_kernel,
        out_shape=jax.ShapeDtypeStruct((B, C), jnp.float32),
        grid_spec=pltpu.PrefetchScalarGridSpec(
            num_scalar_prefetch=0,
            grid=grid,
            in_specs=[
                pl.BlockSpec((block_b, S), lambda b: (b, 0)),
                pl.BlockSpec((block_b, S, H), lambda b: (b, 0, 0)),
                # weights / biases: constant index map -> stay VMEM resident
                pl.BlockSpec((5 * H, 2 * H), lambda b: (0, 0)),
                pl.BlockSpec((1, 2 * H), lambda b: (0, 0)),
                pl.BlockSpec((2 * H, C), lambda b: (0, 0)),
                pl.BlockSpec((1, C), lambda b: (0, 0)),
            ],
            out_specs=pl.BlockSpec((block_b, C), lambda b: (b, 0)),
        ),
        compiler_params=pltpu.CompilerParams(
            dimension_semantics=("parallel",),
            vmem_limit_bytes=vmem_limit_bytes,
        ),
    )(ids, hidden_states, w_fc_t, b_fc_row, w_out_t, b_out_row)
    return out


def fusion_classifier_reference(hidden_states, input_ids, w_fc, b_fc, w_out,
                                b_out):
    """Pure-JAX reference mirroring the PyTorch forward (eval mode)."""
    pad = input_ids == 0
    cls = input_ids == 1
    sep = input_ids == 2
    content = ~(pad | cls | sep)
    tmp = jnp.cumsum(sep.astype(jnp.int32), axis=1) > 0
    b_m = content & tmp
    a_m = jnp.logical_xor(content, b_m)

    hs = hidden_states.astype(jnp.float32) * pad.astype(jnp.float32)[..., None]
    last_h = jnp.max(hs, axis=1)
    a_h = jnp.max(hs * a_m.astype(jnp.float32)[..., None], axis=1)
    b_h = jnp.max(hs * b_m.astype(jnp.float32)[..., None], axis=1)
    a_sub_b = jnp.abs(a_h - b_h)
    a_mul_b = a_h * b_h
    fusion = jnp.concatenate([last_h, a_h, b_h, a_sub_b, a_mul_b], axis=-1)
    z = jnp.maximum(fusion @ w_fc.T + b_fc, 0.0)
    return z @ w_out.T + b_out


if __name__ == "__main__":
    B, S, H, C = 16, 16, 32, 4
    key = jax.random.PRNGKey(0)
    k1, k2, k3, k4, k5 = jax.random.split(key, 5)

    hidden_states = jax.random.normal(k1, (B, S, H), dtype=jnp.float32)

    # token ids: [CLS]=1, content >= 3, [SEP]=2 (two of them), [PAD]=0 at tail
    content_ids = jax.random.randint(k2, (B, S), 3, 100)
    pos = jnp.arange(S)[None, :]
    row = jnp.arange(B)[:, None]
    sep1 = 4 + (row % 3)
    sep2 = 10 + (row % 2)
    ids = jnp.where(pos == 0, 1, content_ids)
    ids = jnp.where((pos == sep1) | (pos == sep2), 2, ids)
    ids = jnp.where(pos > sep2, 0, ids)
    input_ids = ids.astype(jnp.int32)

    # nn.Linear(5H, 2H) and nn.Linear(2H, C) parameters
    w_fc = jax.random.normal(k3, (2 * H, 5 * H), dtype=jnp.float32) / jnp.sqrt(5.0 * H)
    b_fc = jax.random.normal(k4, (2 * H,), dtype=jnp.float32) * 0.01
    w_out = jax.random.normal(k5, (C, 2 * H), dtype=jnp.float32) / jnp.sqrt(2.0 * H)
    b_out = jnp.zeros((C,), dtype=jnp.float32)

    out = fusion_classifier_forward(hidden_states, input_ids, w_fc, b_fc,
                                    w_out, b_out)
    jax.block_until_ready(out)

    ref = fusion_classifier_reference(hidden_states, input_ids, w_fc, b_fc,
                                      w_out, b_out)
    assert out.shape == (B, C)
    assert jnp.allclose(out, ref, atol=1e-4, rtol=1e-4), "mismatch vs reference"

    print("KERNEL_OK")
</pallas_src>

<mosaic_0001>
module attributes {stable_mosaic.version = 11 : i64} {
  func.func @fusion_classifier_kernel(%arg0: i32, %arg1: memref<8x16xi32, #tpu.memory_space<vmem>>, %arg2: memref<8x16x32xf32, #tpu.memory_space<vmem>>, %arg3: memref<160x64xf32, #tpu.memory_space<vmem>>, %arg4: memref<1x64xf32, #tpu.memory_space<vmem>>, %arg5: memref<64x4xf32, #tpu.memory_space<vmem>>, %arg6: memref<1x4xf32, #tpu.memory_space<vmem>>, %arg7: memref<8x4xf32, #tpu.memory_space<vmem>>) attributes {dimension_semantics = [#tpu.dimension_semantics<parallel>], iteration_bounds = array<i64: 2>, scalar_prefetch = 0 : i64, scratch_operands = 0 : i64, tpu.core_type = #tpu.core_type<tc>, window_params = [{transform_indices = @transform_0, window_bounds = array<i64: 8, 16>}, {transform_indices = @transform_1, window_bounds = array<i64: 8, 16, 32>}, {pipeline_mode = #tpu.pipeline_mode<synchronous>, transform_indices = @transform_2, window_bounds = array<i64: 160, 64>}, {pipeline_mode = #tpu.pipeline_mode<synchronous>, transform_indices = @transform_3, window_bounds = array<i64: 1, 64>}, {pipeline_mode = #tpu.pipeline_mode<synchronous>, transform_indices = @transform_4, window_bounds = array<i64: 64, 4>}, {pipeline_mode = #tpu.pipeline_mode<synchronous>, transform_indices = @transform_5, window_bounds = array<i64: 1, 4>}, {transform_indices = @transform_6, window_bounds = array<i64: 8, 4>}]} {
    %c0 = arith.constant 0 : index
    %c0_0 = arith.constant 0 : index
    %0 = vector.load %arg1[%c0, %c0_0] : memref<8x16xi32, #tpu.memory_space<vmem>>, vector<8x16xi32>
    %c0_1 = arith.constant 0 : index
    %c0_2 = arith.constant 0 : index
    %c0_3 = arith.constant 0 : index
    %1 = vector.load %arg2[%c0_1, %c0_2, %c0_3] : memref<8x16x32xf32, #tpu.memory_space<vmem>>, vector<8x16x32xf32>
    %c0_i32 = arith.constant 0 : i32
    %2 = vector.broadcast %c0_i32 : i32 to vector<8x16xi32>
    %3 = arith.cmpi eq, %0, %2 : vector<8x16xi32>
    %c1_i32 = arith.constant 1 : i32
    %4 = vector.broadcast %c1_i32 : i32 to vector<8x16xi32>
    %5 = arith.cmpi eq, %0, %4 : vector<8x16xi32>
    %c2_i32 = arith.constant 2 : i32
    %6 = vector.broadcast %c2_i32 : i32 to vector<8x16xi32>
    %7 = arith.cmpi eq, %0, %6 : vector<8x16xi32>
    %8 = arith.ori %3, %5 : vector<8x16xi1>
    %9 = arith.ori %8, %7 : vector<8x16xi1>
    %cst = arith.constant dense<true> : vector<8x16xi1>
    %10 = arith.xori %9, %cst : vector<8x16xi1>
    %11 = tpu.iota {dimensions = array<i32: 1>} : vector<8x16xi32>
    %c16_i32 = arith.constant 16 : i32
    %12 = vector.broadcast %c16_i32 : i32 to vector<8x16xi32>
    %13 = arith.select %7, %11, %12 : vector<8x16xi1>, vector<8x16xi32>
    %cst_4 = arith.constant dense<2147483647> : vector<8xi32>
    %14 = vector.multi_reduction <minsi>, %13, %cst_4 [1] : vector<8x16xi32> to vector<8xi32>
    %15 = vector.shape_cast %14 : vector<8xi32> to vector<8x1xi32>
    %16 = vector.broadcast %15 : vector<8x1xi32> to vector<8x16xi32>
    %17 = arith.cmpi sge, %11, %16 : vector<8x16xi32>
    %18 = arith.andi %10, %17 : vector<8x16xi1>
    %cst_5 = arith.constant dense<true> : vector<8x16xi1>
    %19 = arith.xori %17, %cst_5 : vector<8x16xi1>
    %20 = arith.andi %10, %19 : vector<8x16xi1>
    %21 = arith.extui %3 : vector<8x16xi1> to vector<8x16xi32>
    %22 = arith.sitofp %21 : vector<8x16xi32> to vector<8x16xf32>
    %23 = vector.shape_cast %22 : vector<8x16xf32> to vector<8x16x1xf32>
    %24 = arith.extui %20 : vector<8x16xi1> to vector<8x16xi32>
    %25 = arith.sitofp %24 : vector<8x16xi32> to vector<8x16xf32>
    %26 = vector.shape_cast %25 : vector<8x16xf32> to vector<8x16x1xf32>
    %27 = arith.extui %18 : vector<8x16xi1> to vector<8x16xi32>
    %28 = arith.sitofp %27 : vector<8x16xi32> to vector<8x16xf32>
    %29 = vector.shape_cast %28 : vector<8x16xf32> to vector<8x16x1xf32>
    %30 = vector.broadcast %23 : vector<8x16x1xf32> to vector<8x16x32xf32>
    %31 = arith.mulf %1, %30 : vector<8x16x32xf32>
    %cst_6 = arith.constant dense<0xFF800000> : vector<8x32xf32>
    %32 = vector.multi_reduction <maximumf>, %31, %cst_6 [1] : vector<8x16x32xf32> to vector<8x32xf32>
    %33 = vector.broadcast %26 : vector<8x16x1xf32> to vector<8x16x32xf32>
    %34 = arith.mulf %31, %33 : vector<8x16x32xf32>
    %cst_7 = arith.constant dense<0xFF800000> : vector<8x32xf32>
    %35 = vector.multi_reduction <maximumf>, %34, %cst_7 [1] : vector<8x16x32xf32> to vector<8x32xf32>
    %36 = vector.broadcast %29 : vector<8x16x1xf32> to vector<8x16x32xf32>
    %37 = arith.mulf %31, %36 : vector<8x16x32xf32>
    %cst_8 = arith.constant dense<0xFF800000> : vector<8x32xf32>
    %38 = vector.multi_reduction <maximumf>, %37, %cst_8 [1] : vector<8x16x32xf32> to vector<8x32xf32>
    %39 = arith.subf %35, %38 : vector<8x32xf32>
    %40 = math.absf %39 : vector<8x32xf32>
    %41 = arith.mulf %35, %38 : vector<8x32xf32>
    %c0_9 = arith.constant 0 : index
    %c0_10 = arith.constant 0 : index
    %42 = vector.load %arg4[%c0_9, %c0_10] : memref<1x64xf32, #tpu.memory_space<vmem>>, vector<1x64xf32>
    %c0_11 = arith.constant 0 : index
    %c0_12 = arith.constant 0 : index
    %43 = vector.load %arg3[%c0_11, %c0_12] : memref<160x64xf32, #tpu.memory_space<vmem>>, vector<32x64xf32>
    %cst_13 = arith.constant dense<0.000000e+00> : vector<8x64xf32>
    %44 = tpu.matmul %32, %43, %cst_13 {dimension_numbers = #tpu.dot_dimension_numbers<[1], [0], [0], [1], [0, 0, 1, 1], [], []>} : vector<8x32xf32>, vector<32x64xf32>, vector<8x64xf32> -> vector<8x64xf32>
    %45 = vector.broadcast %42 : vector<1x64xf32> to vector<8x64xf32>
    %46 = arith.addf %45, %44 : vector<8x64xf32>
    %c32 = arith.constant 32 : index
    %c0_14 = arith.constant 0 : index
    %47 = vector.load %arg3[%c32, %c0_14] : memref<160x64xf32, #tpu.memory_space<vmem>>, vector<32x64xf32>
    %cst_15 = arith.constant dense<0.000000e+00> : vector<8x64xf32>
    %48 = tpu.matmul %35, %47, %cst_15 {dimension_numbers = #tpu.dot_dimension_numbers<[1], [0], [0], [1], [0, 0, 1, 1], [], []>} : vector<8x32xf32>, vector<32x64xf32>, vector<8x64xf32> -> vector<8x64xf32>
    %49 = arith.addf %46, %48 : vector<8x64xf32>
    %c64 = arith.constant 64 : index
    %c0_16 = arith.constant 0 : index
    %50 = vector.load %arg3[%c64, %c0_16] : memref<160x64xf32, #tpu.memory_space<vmem>>, vector<32x64xf32>
    %cst_17 = arith.constant dense<0.000000e+00> : vector<8x64xf32>
    %51 = tpu.matmul %38, %50, %cst_17 {dimension_numbers = #tpu.dot_dimension_numbers<[1], [0], [0], [1], [0, 0, 1, 1], [], []>} : vector<8x32xf32>, vector<32x64xf32>, vector<8x64xf32> -> vector<8x64xf32>
    %52 = arith.addf %49, %51 : vector<8x64xf32>
    %c96 = arith.constant 96 : index
    %c0_18 = arith.constant 0 : index
    %53 = vector.load %arg3[%c96, %c0_18] : memref<160x64xf32, #tpu.memory_space<vmem>>, vector<32x64xf32>
    %cst_19 = arith.constant dense<0.000000e+00> : vector<8x64xf32>
    %54 = tpu.matmul %40, %53, %cst_19 {dimension_numbers = #tpu.dot_dimension_numbers<[1], [0], [0], [1], [0, 0, 1, 1], [], []>} : vector<8x32xf32>, vector<32x64xf32>, vector<8x64xf32> -> vector<8x64xf32>
    %55 = arith.addf %52, %54 : vector<8x64xf32>
    %c128 = arith.constant 128 : index
    %c0_20 = arith.constant 0 : index
    %56 = vector.load %arg3[%c128, %c0_20] : memref<160x64xf32, #tpu.memory_space<vmem>>, vector<32x64xf32>
    %cst_21 = arith.constant dense<0.000000e+00> : vector<8x64xf32>
    %57 = tpu.matmul %41, %56, %cst_21 {dimension_numbers = #tpu.dot_dimension_numbers<[1], [0], [0], [1], [0, 0, 1, 1], [], []>} : vector<8x32xf32>, vector<32x64xf32>, vector<8x64xf32> -> vector<8x64xf32>
    %58 = arith.addf %55, %57 : vector<8x64xf32>
    %cst_22 = arith.constant 0.000000e+00 : f32
    %59 = vector.broadcast %cst_22 : f32 to vector<8x64xf32>
    %60 = arith.maximumf %58, %59 : vector<8x64xf32>
    %c0_23 = arith.constant 0 : index
    %c0_24 = arith.constant 0 : index
    %61 = vector.load %arg5[%c0_23, %c0_24] : memref<64x4xf32, #tpu.memory_space<vmem>>, vector<64x4xf32>
    %cst_25 = arith.constant dense<0.000000e+00> : vector<8x4xf32>
    %62 = tpu.matmul %60, %61, %cst_25 {dimension_numbers = #tpu.dot_dimension_numbers<[1], [0], [0], [1], [0, 0, 1, 1], [], []>} : vector<8x64xf32>, vector<64x4xf32>, vector<8x4xf32> -> vector<8x4xf32>
    %c0_26 = arith.constant 0 : index
    %c0_27 = arith.constant 0 : index
    %63 = vector.load %arg6[%c0_26, %c0_27] : memref<1x4xf32, #tpu.memory_space<vmem>>, vector<1x4xf32>
    %64 = vector.broadcast %63 : vector<1x4xf32> to vector<8x4xf32>
    %65 = arith.addf %62, %64 : vector<8x4xf32>
    %c0_28 = arith.constant 0 : index
    %c0_29 = arith.constant 0 : index
    %66 = vector.load %arg7[%c0_28, %c0_29] : memref<8x4xf32, #tpu.memory_space<vmem>>, vector<8x4xf32>
    tpu.vector_store %arg7[%c0_28, %c0_29], %65 {strides = array<i32>} : memref<8x4xf32, #tpu.memory_space<vmem>>, vector<8x4xf32>,
    return
  }
  func.func @transform_0(%arg0: i32) -> (i32, i32) {
    %c0_i32 = arith.constant 0 : i32
    %c0_i32_0 = arith.constant 0 : i32
    return %arg0, %c0_i32 : i32, i32
  }
  func.func @transform_1(%arg0: i32) -> (i32, i32, i32) {
    %c0_i32 = arith.constant 0 : i32
    %c0_i32_0 = arith.constant 0 : i32
    %c0_i32_1 = arith.constant 0 : i32
    return %arg0, %c0_i32, %c0_i32_0 : i32, i32, i32
  }
  func.func @transform_2(%arg0: i32) -> (i32, i32) {
    %c0_i32 = arith.constant 0 : i32
    %c0_i32_0 = arith.constant 0 : i32
    %c0_i32_1 = arith.constant 0 : i32
    return %c0_i32, %c0_i32_0 : i32, i32
  }
  func.func @transform_3(%arg0: i32) -> (i32, i32) {
    %c0_i32 = arith.constant 0 : i32
    %c0_i32_0 = arith.constant 0 : i32
    %c0_i32_1 = arith.constant 0 : i32
    return %c0_i32, %c0_i32_0 : i32, i32
  }
  func.func @transform_4(%arg0: i32) -> (i32, i32) {
    %c0_i32 = arith.constant 0 : i32
    %c0_i32_0 = arith.constant 0 : i32
    %c0_i32_1 = arith.constant 0 : i32
    return %c0_i32, %c0_i32_0 : i32, i32
  }
  func.func @transform_5(%arg0: i32) -> (i32, i32) {
    %c0_i32 = arith.constant 0 : i32
    %c0_i32_0 = arith.constant 0 : i32
    %c0_i32_1 = arith.constant 0 : i32
    return %c0_i32, %c0_i32_0 : i32, i32
  }
  func.func @transform_6(%arg0: i32) -> (i32, i32) {
    %c0_i32 = arith.constant 0 : i32
    %c0_i32_0 = arith.constant 0 : i32
    return %arg0, %c0_i32 : i32, i32
  }
}

</mosaic_0001>

<llo_original>
// kernel: tpu_custom_call.1
$region0: #{tpu_custom_call.1}
  #allocation0 [shape = 'u32[]', space=smem, size = 0x4, offset = 0x4, fixed_abs, tag = 'smem constant byte address 0x4 - core index']
  #allocation1 [shape = 'u32[144,128]{1,0:T(1,128)}', space=vmem, size = 0x12000, scoped, tag = 'internal scratch']
  %s0 = inlined_call_operand.vmem [shape: s32[16,16], index: 0, kind: input, shape index: {}]
  %s1 = inlined_call_operand.vmem [shape: f32[16,16,32], index: 1, kind: input, shape index: {}]
  %s2 = inlined_call_operand.vmem [shape: f32[160,64], index: 2, kind: input, shape index: {}]
  %s3 = inlined_call_operand.vmem [shape: f32[1,64], index: 3, kind: input, shape index: {}]
  %s4 = inlined_call_operand.vmem [shape: f32[64,4], index: 4, kind: input, shape index: {}]
  %s5 = inlined_call_operand.vmem [shape: f32[1,4], index: 5, kind: input, shape index: {}]
  %s6 = inlined_call_operand.vmem [shape: f32[16,4], index: 6, kind: output, shape index: {}]
  %s7 = sld [smem:[#allocation0]]
  $region57: #{tpu_custom_call.1} parent=0
    _
  %s9 = ssub.s32 1, %s7
  %s10 = scalar_select 0, %s9, %s7
  loop: start=0, step=1, limit=4
  $region2: #{tpu_custom_call.1} parent=0 // loop_pre_header
    _
  $region3: #{tpu_custom_call.1} parent=0 // loop_header
    %s12 = sphi 0, %s16
    %p13 = scmp.ge.s32.totalorder %s12, 4
    %s22 = sphi 0, %s24
    %s25 = sphi 0, %s22
    %s26 = sphi 0, %s25
    %s42 = sphi 0, %s26
    %s48 = sphi 0, %s50
    %s51 = sphi 0, %s48
    %s52 = sphi 0, %s51
    %s68 = sphi 0, %s52
    %s72 = sphi 0, %s72
    %s74 = sphi 0, %s72
    %s75 = sphi 0, %s74
    %s89 = sphi 0, %s75
    %s93 = sphi 0, %s93
    %s95 = sphi 0, %s93
    %s96 = sphi 0, %s95
    %s110 = sphi 0, %s96
    %s114 = sphi 0, %s114
    %s116 = sphi 0, %s114
    %s117 = sphi 0, %s116
    %s131 = sphi 0, %s117
    %s135 = sphi 0, %s135
    %s137 = sphi 0, %s135
    %s138 = sphi 0, %s137
    %s152 = sphi 0, %s138
    %s158 = sphi 0, %s160
    %s161 = sphi 0, %s158
    %s162 = sphi 0, %s161
    %s178 = sphi 0, %s162
  $region4: #{tpu_custom_call.1} parent=0 // loop_header_branch
    %15 = sbr.rel (%p13) target = $region8
  $region5: #{tpu_custom_call.1} parent=0 // loop_body
    %s17 = ssub.s32 %s12, 1
    %s18 = ssub.s32 %s12, 2
    %s19 = sadd.s32 %s12, 1
    %s20 = ssub.s32 %s12, %s19
    %p21 = scmp.eq.s32.totalorder %s20, 0
    %s23 = sadd.s32 %s22, 1
    %s24 = scalar_select %p21, %s22, %s23
    %p27 = pneg %p21
    %p28 = scmp.eq.s32.totalorder %s12, 1
    %p29 = por %p27, %p28
    %p30 = scmp.ne.s32.totalorder %s22, %s25
    %p31 = scmp.eq.s32.totalorder %s12, 0
    %p32 = por %p30, %p31
    %p33 = scmp.ne.s32.totalorder %s22, %s25
    %p34 = scmp.eq.s32.totalorder %s17, 1
    %p35 = por %p33, %p34
    %p36 = scmp.ne.s32.totalorder %s25, %s26
    %p37 = scmp.eq.s32.totalorder %s17, 0
    %p38 = por %p36, %p37
    %p39 = scmp.ne.s32.totalorder %s25, %s26
    %p40 = scmp.eq.s32.totalorder %s18, 1
    %p41 = por %p39, %p40
    %p43 = scmp.ne.s32.totalorder %s26, %s42
    %p44 = scmp.eq.s32.totalorder %s18, 0
    %p45 = por %p43, %p44
    %s46 = ssub.s32 %s12, %s19
    %p47 = scmp.eq.s32.totalorder %s46, 0
    %s49 = sadd.s32 %s48, 1
    %s50 = scalar_select %p47, %s48, %s49
    %p53 = pneg %p47
    %p54 = scmp.eq.s32.totalorder %s12, 1
    %p55 = por %p53, %p54
    %p56 = scmp.ne.s32.totalorder %s48, %s51
    %p57 = scmp.eq.s32.totalorder %s12, 0
    %p58 = por %p56, %p57
    %p59 = scmp.ne.s32.totalorder %s48, %s51
    %p60 = scmp.eq.s32.totalorder %s17, 1
    %p61 = por %p59, %p60
    %p62 = scmp.ne.s32.totalorder %s51, %s52
    %p63 = scmp.eq.s32.totalorder %s17, 0
    %p64 = por %p62, %p63
    %p65 = scmp.ne.s32.totalorder %s51, %s52
    %p66 = scmp.eq.s32.totalorder %s18, 1
    %p67 = por %p65, %p66
    %p69 = scmp.ne.s32.totalorder %s52, %s68
    %p70 = scmp.eq.s32.totalorder %s18, 0
    %p71 = por %p69, %p70
    %s73 = sadd.s32 %s72, 1
    %p76 = scmp.eq.s32.totalorder %s12, 1
    %p77 = scmp.ne.s32.totalorder %s72, %s74
    %p78 = scmp.eq.s32.totalorder %s12, 0
    %p79 = por %p77, %p78
    %p80 = scmp.ne.s32.totalorder %s72, %s74
    %p81 = scmp.eq.s32.totalorder %s17, 1
    %p82 = por %p80, %p81
    %p83 = scmp.ne.s32.totalorder %s74, %s75
    %p84 = scmp.eq.s32.totalorder %s17, 0
    %p85 = por %p83, %p84
    %p86 = scmp.ne.s32.totalorder %s74, %s75
    %p87 = scmp.eq.s32.totalorder %s18, 1
    %p88 = por %p86, %p87
    %p90 = scmp.ne.s32.totalorder %s75, %s89
    %p91 = scmp.eq.s32.totalorder %s18, 0
    %p92 = por %p90, %p91
    %s94 = sadd.s32 %s93, 1
    %p97 = scmp.eq.s32.totalorder %s12, 1
    %p98 = scmp.ne.s32.totalorder %s93, %s95
    %p99 = scmp.eq.s32.totalorder %s12, 0
    %p100 = por %p98, %p99
    %p101 = scmp.ne.s32.totalorder %s93, %s95
    %p102 = scmp.eq.s32.totalorder %s17, 1
    %p103 = por %p101, %p102
    %p104 = scmp.ne.s32.totalorder %s95, %s96
    %p105 = scmp.eq.s32.totalorder %s17, 0
    %p106 = por %p104, %p105
    %p107 = scmp.ne.s32.totalorder %s95, %s96
    %p108 = scmp.eq.s32.totalorder %s18, 1
    %p109 = por %p107, %p108
    %p111 = scmp.ne.s32.totalorder %s96, %s110
    %p112 = scmp.eq.s32.totalorder %s18, 0
    %p113 = por %p111, %p112
    %s115 = sadd.s32 %s114, 1
    %p118 = scmp.eq.s32.totalorder %s12, 1
    %p119 = scmp.ne.s32.totalorder %s114, %s116
    %p120 = scmp.eq.s32.totalorder %s12, 0
    %p121 = por %p119, %p120
    %p122 = scmp.ne.s32.totalorder %s114, %s116
    %p123 = scmp.eq.s32.totalorder %s17, 1
    %p124 = por %p122, %p123
    %p125 = scmp.ne.s32.totalorder %s116, %s117
    %p126 = scmp.eq.s32.totalorder %s17, 0
    %p127 = por %p125, %p126
    %p128 = scmp.ne.s32.totalorder %s116, %s117
    %p129 = scmp.eq.s32.totalorder %s18, 1
    %p130 = por %p128, %p129
    %p132 = scmp.ne.s32.totalorder %s117, %s131
    %p133 = scmp.eq.s32.totalorder %s18, 0
    %p134 = por %p132, %p133
    %s136 = sadd.s32 %s135, 1
    %p139 = scmp.eq.s32.totalorder %s12, 1
    %p140 = scmp.ne.s32.totalorder %s135, %s137
    %p141 = scmp.eq.s32.totalorder %s12, 0
    %p142 = por %p140, %p141
    %p143 = scmp.ne.s32.totalorder %s135, %s137
    %p144 = scmp.eq.s32.totalorder %s17, 1
    %p145 = por %p143, %p144
    %p146 = scmp.ne.s32.totalorder %s137, %s138
    %p147 = scmp.eq.s32.totalorder %s17, 0
    %p148 = por %p146, %p147
    %p149 = scmp.ne.s32.totalorder %s137, %s138
    %p150 = scmp.eq.s32.totalorder %s18, 1
    %p151 = por %p149, %p150
    %p153 = scmp.ne.s32.totalorder %s138, %s152
    %p154 = scmp.eq.s32.totalorder %s18, 0
    %p155 = por %p153, %p154
    %s156 = ssub.s32 %s12, %s19
    %p157 = scmp.eq.s32.totalorder %s156, 0
    %s159 = sadd.s32 %s158, 1
    %s160 = scalar_select %p157, %s158, %s159
    %p163 = pneg %p157
    %p164 = scmp.eq.s32.totalorder %s12, 1
    %p165 = por %p163, %p164
    %p166 = scmp.ne.s32.totalorder %s158, %s161
    %p167 = scmp.eq.s32.totalorder %s12, 0
    %p168 = por %p166, %p167
    %p169 = scmp.ne.s32.totalorder %s158, %s161
    %p170 = scmp.eq.s32.totalorder %s17, 1
    %p171 = por %p169, %p170
    %p172 = scmp.ne.s32.totalorder %s161, %s162
    %p173 = scmp.eq.s32.totalorder %s17, 0
    %p174 = por %p172, %p173
    %p175 = scmp.ne.s32.totalorder %s161, %s162
    %p176 = scmp.eq.s32.totalorder %s18, 1
    %p177 = por %p175, %p176
    %p179 = scmp.ne.s32.totalorder %s162, %s178
    %p180 = scmp.eq.s32.totalorder %s18, 0
    %p181 = por %p179, %p180
    %p182 = scmp.le.s32.totalorder 1, %s12
    %p183 = scmp.lt.s32.totalorder %s12, 3
    %p184 = pnand %p182, %p183
    %p185 = pneg %p184
    // Predicated region
    $region9: #{tpu_custom_call.1} parent=5 // pred_check
      _
    $region10: #{tpu_custom_call.1} parent=5 // pred_check_branch
      %187 = sbr.rel (%p184) target = $region12
    $region11: #{tpu_custom_call.1} parent=5 // pred_region
      %s188 = ssub.s32 %s12, 1
      // Predicated region
      $region13: #{tpu_custom_call.1} parent=11 // pred_check
        %p189 = pneg %p85
      $region14: #{tpu_custom_call.1} parent=11 // pred_check_branch
        %191 = sbr.rel (%p189) target = $region16
      $region15: #{tpu_custom_call.1} parent=11 // pred_region
        _
      $region16: #{tpu_custom_call.1} parent=11 // pred_fallthru
        _
      // Predicated region
      $region17: #{tpu_custom_call.1} parent=11 // pred_check
        %p192 = pneg %p106
      $region18: #{tpu_custom_call.1} parent=11 // pred_check_branch
        %194 = sbr.rel (%p192) target = $region20
      $region19: #{tpu_custom_call.1} parent=11 // pred_region
        _
      $region20: #{tpu_custom_call.1} parent=11 // pred_fallthru
        _
      // Predicated region
      $region21: #{tpu_custom_call.1} parent=11 // pred_check
        %p195 = pneg %p127
      $region22: #{tpu_custom_call.1} parent=11 // pred_check_branch
        %197 = sbr.rel (%p195) target = $region24
      $region23: #{tpu_custom_call.1} parent=11 // pred_region
        _
      $region24: #{tpu_custom_call.1} parent=11 // pred_fallthru
        _
      // Predicated region
      $region25: #{tpu_custom_call.1} parent=11 // pred_check
        %p198 = pneg %p148
      $region26: #{tpu_custom_call.1} parent=11 // pred_check_branch
        %200 = sbr.rel (%p198) target = $region28
      $region27: #{tpu_custom_call.1} parent=11 // pred_region
        _
      $region28: #{tpu_custom_call.1} parent=11 // pred_fallthru
        _
    $region12: #{tpu_custom_call.1} parent=5 // pred_fallthru
      _
    %p201 = scmp.lt.s32.totalorder %s12, 2
    // Predicated region
    $region29: #{tpu_custom_call.1} parent=5 // pred_check
      %p202 = pneg %p201
    $region30: #{tpu_custom_call.1} parent=5 // pred_check_branch
      %204 = sbr.rel (%p202) target = $region32
    $region31: #{tpu_custom_call.1} parent=5 // pred_region
      // Predicated region
      $region33: #{tpu_custom_call.1} parent=31 // pred_check
        %p205 = pneg %p32
      $region34: #{tpu_custom_call.1} parent=31 // pred_check_branch
        %207 = sbr.rel (%p205) target = $region36
      $region35: #{tpu_custom_call.1} parent=31 // pred_region
        %p208 = scmp.lt.s32.totalorder %s12, 1
        %s209 = scalar_select %p208, %s12, 1
        %s210 = smul.addr %s209, 8
        %s211 = scalar_lea.vmem %s0, %s210
      $region36: #{tpu_custom_call.1} parent=31 // pred_fallthru
        _
      // Predicated region
      $region37: #{tpu_custom_call.1} parent=31 // pred_check
        %p212 = pneg %p58
      $region38: #{tpu_custom_call.1} parent=31 // pred_check_branch
        %214 = sbr.rel (%p212) target = $region40
      $region39: #{tpu_custom_call.1} parent=31 // pred_region
        %s215 = smul.u32 8, %s12
        %p216 = scmp.lt.s32.totalorder %s215, 15
        %s217 = scalar_select %p216, %s215, 15
        %s218 = smul.addr %s217, 2
        %s219 = smul.addr %s218, 8
        %s220 = scalar_lea.vmem %s1, %s219
        %s221 = smul.u32 8, %s12
      $region40: #{tpu_custom_call.1} parent=31 // pred_fallthru
        _
    $region32: #{tpu_custom_call.1} parent=5 // pred_fallthru
      _
    %p222 = scmp.le.s32.totalorder 1, %s12
    %p223 = scmp.lt.s32.totalorder %s12, 3
    %p224 = pnand %p222, %p223
    %p225 = pneg %p224
    // Predicated region
    $region41: #{tpu_custom_call.1} parent=5 // pred_check
      _
    $region42: #{tpu_custom_call.1} parent=5 // pred_check_branch
      %227 = sbr.rel (%p224) target = $region44
    $region43: #{tpu_custom_call.1} parent=5 // pred_region
      %s228 = ssub.s32 %s12, 1
      %p229 = scmp.lt.s32.totalorder %s17, 1
      %s230 = scalar_select %p229, %s17, 1
      %s231 = smul.addr %s230, 8
      %s232 = scalar_lea.vmem %s0, %s231
      %p233 = pneg %p38
      %p234 = pneg %p35
      %s235 = smul.u32 8, %s17
      %p236 = scmp.lt.s32.totalorder %s235, 15
      %s237 = scalar_select %p236, %s235, 15
      %s238 = smul.addr %s237, 2
      %s239 = smul.addr %s238, 8
      %s240 = scalar_lea.vmem %s1, %s239
      %p241 = pneg %p64
      %p242 = pneg %p61
      %p243 = pneg %p85
      %p244 = pneg %p82
      %p245 = pneg %p106
      %p246 = pneg %p103
      %p247 = pneg %p127
      %p248 = pneg %p124
      %p249 = pneg %p148
      %p250 = pneg %p145
      %p251 = pneg %p174
      %p252 = pneg %p171
      %p253 = scmp.lt.s32.totalorder %s17, 1
      %s254 = scalar_select %p253, %s17, 1
      %s255 = smul.addr %s254, 8
      %s256 = scalar_lea.vmem %s6, %s255
      %p257 = scmp.lt.s32.totalorder %s17, 1
      %s258 = scalar_select %p257, %s17, 1
      %s259 = smul.addr %s258, 8
      %s260 = scalar_lea.vmem %s0, %s259
      %s261 = smul.u32 8, %s17
      %p262 = scmp.lt.s32.totalorder %s261, 15
      %s263 = scalar_select %p262, %s261, 15
      %s264 = smul.addr %s263, 2
      %s265 = smul.addr %s264, 8
      %s266 = scalar_lea.vmem %s1, %s265
      %s267 = smul.u32 8, %s17
      %p268 = scmp.lt.s32.totalorder %s17, 1
      %s269 = scalar_select %p268, %s17, 1
      %s270 = smul.addr %s269, 8
      %s271 = scalar_lea.vmem %s6, %s270
      %v272 = vld [vmem:[%s260] sm:$0xff]
      %v273 = vld [vmem:[%s266] sm:$0xff]
      %v274 = vld [vmem:[%s266 + $0x8] sm:$0xff]
      %v275 = vld [vmem:[%s266 + $0x10] sm:$0xff]
      %v276 = vld [vmem:[%s266 + $0x18] sm:$0xff]
      %v277 = vld [vmem:[%s266 + $0x20] sm:$0xff]
      %v278 = vld [vmem:[%s266 + $0x28] sm:$0xff]
      %v279 = vld [vmem:[%s266 + $0x30] sm:$0xff]
      %v280 = vld [vmem:[%s266 + $0x38] sm:$0xff]
      %v281 = vld [vmem:[%s266 + $0x40] sm:$0xff]
      %v282 = vld [vmem:[%s266 + $0x48] sm:$0xff]
      %v283 = vld [vmem:[%s266 + $0x50] sm:$0xff]
      %v284 = vld [vmem:[%s266 + $0x58] sm:$0xff]
      %v285 = vld [vmem:[%s266 + $0x60] sm:$0xff]
      %v286 = vld [vmem:[%s266 + $0x68] sm:$0xff]
      %v287 = vld [vmem:[%s266 + $0x70] sm:$0xff]
      %v288 = vld [vmem:[%s266 + $0x78] sm:$0xff]
      %vm289 = vcmp.eq.s32.totalorder %v272, 0
      %vm290 = vcmp.eq.s32.totalorder %v272, 1
      %vm291 = vcmp.eq.s32.totalorder %v272, 2
      %vm292 = vmor %vm289, %vm290
      %vm293 = vmor %vm292, %vm291
      %vm294 = vmxor %vm293, 1
      %v295 = vlaneseq
      %v296 = vand.u32 %v295, 127
      %v297 = vsel %vm291, %v296, 16
      %vm298 = vcmask 130048
      %v299 = vsel %vm298, %v297, 2147483647
      %v300 = vand.u32 %v299, 65535
      %v301 = vshra.s32 %v299, 16
      %v302 = vcvt.s32.f32 %v300
      %v303 = vcvt.s32.f32 %v301
      %304 = vmin.xlane.f32.xlu0 %v303
      %v305 = vpop.xlane.xlu0 %304
      %vm306 = vcmp.eq.f32.partialorder %v303, %v305
      %v307 = vsel %vm306, %v302, inf
      %308 = vmin.xlane.f32.xlu0 %v307
      %v309 = vpop.xlane.xlu0 %308
      %v310 = vcvt.f32.s32 %v309
      %v311 = vcvt.f32.s32 %v305
      %v312 = vshll.u32 %v311, 16
      %v313 = vadd.s32 %v312, %v310
      %vm314 = vcmp.ge.s32.totalorder %v296, %v313
      %vm315 = vmand %vm294, %vm314
      %vm316 = vmxor %vm314, 1
      %vm317 = vmand %vm294, %vm316
      %v318 = vsel %vm289, 1, 0
      %v319 = vcvt.s32.f32 %v318
      %v320 = vlaneseq
      %v321 = vshrl.u32 %v320, 7
      %v322 = vsub.s32 0, %v321
      %v323 = vrot.slane %v319, %v322
      %325 = vbcast.lane.b32.xlu0 %v323, 256
      %v326 = vpop.permute.xlu0 %325
      %s328 = sor.u32 256, 8
      %329 = vbcast.lane.b32.xlu0 %v323, %s328
      %v330 = vpop.permute.xlu0 %329
      %v331 = vlaneseq
      %v332 = vshrl.u32 %v331, 7
      %v333 = vsub.s32 1, %v332
      %v334 = vrot.slane %v319, %v333
      %336 = vbcast.lane.b32.xlu0 %v334, 256
      %v337 = vpop.permute.xlu0 %336
      %s339 = sor.u32 256, 8
      %340 = vbcast.lane.b32.xlu0 %v334, %s339
      %v341 = vpop.permute.xlu0 %340
      %v342 = vlaneseq
      %v343 = vshrl.u32 %v342, 7
      %v344 = vsub.s32 2, %v343
      %v345 = vrot.slane %v319, %v344
      %347 = vbcast.lane.b32.xlu0 %v345, 256
      %v348 = vpop.permute.xlu0 %347
      %s350 = sor.u32 256, 8
      %351 = vbcast.lane.b32.xlu0 %v345, %s350
      %v352 = vpop.permute.xlu0 %351
      %v353 = vlaneseq
      %v354 = vshrl.u32 %v353, 7
      %v355 = vsub.s32 3, %v354
      %v356 = vrot.slane %v319, %v355
      %358 = vbcast.lane.b32.xlu0 %v356, 256
      %v359 = vpop.permute.xlu0 %358
      %s361 = sor.u32 256, 8
      %362 = vbcast.lane.b32.xlu0 %v356, %s361
      %v363 = vpop.permute.xlu0 %362
      %v364 = vlaneseq
      %v365 = vshrl.u32 %v364, 7
      %v366 = vsub.s32 4, %v365
      %v367 = vrot.slane %v319, %v366
      %369 = vbcast.lane.b32.xlu0 %v367, 256
      %v370 = vpop.permute.xlu0 %369
      %s372 = sor.u32 256, 8
      %373 = vbcast.lane.b32.xlu0 %v367, %s372
      %v374 = vpop.permute.xlu0 %373
      %v375 = vlaneseq
      %v376 = vshrl.u32 %v375, 7
      %v377 = vsub.s32 5, %v376
      %v378 = vrot.slane %v319, %v377
      %380 = vbcast.lane.b32.xlu0 %v378, 256
      %v381 = vpop.permute.xlu0 %380
      %s383 = sor.u32 256, 8
      %384 = vbcast.lane.b32.xlu0 %v378, %s383
      %v385 = vpop.permute.xlu0 %384
      %v386 = vlaneseq
      %v387 = vshrl.u32 %v386, 7
      %v388 = vsub.s32 6, %v387
      %v389 = vrot.slane %v319, %v388
      %391 = vbcast.lane.b32.xlu0 %v389, 256
      %v392 = vpop.permute.xlu0 %391
      %s394 = sor.u32 256, 8
      %395 = vbcast.lane.b32.xlu0 %v389, %s394
      %v396 = vpop.permute.xlu0 %395
      %v397 = vlaneseq
      %v398 = vshrl.u32 %v397, 7
      %v399 = vsub.s32 7, %v398
      %v400 = vrot.slane %v319, %v399
      %402 = vbcast.lane.b32.xlu0 %v400, 256
      %v403 = vpop.permute.xlu0 %402
      %s405 = sor.u32 256, 8
      %406 = vbcast.lane.b32.xlu0 %v400, %s405
      %v407 = vpop.permute.xlu0 %406
      %v408 = vsel %vm317, 1, 0
      %v409 = vcvt.s32.f32 %v408
      %v410 = vlaneseq
      %v411 = vshrl.u32 %v410, 7
      %v412 = vsub.s32 0, %v411
      %v413 = vrot.slane %v409, %v412
      %415 = vbcast.lane.b32.xlu0 %v413, 256
      %v416 = vpop.permute.xlu0 %415
      %s418 = sor.u32 256, 8
      %419 = vbcast.lane.b32.xlu0 %v413, %s418
      %v420 = vpop.permute.xlu0 %419
      %v421 = vlaneseq
      %v422 = vshrl.u32 %v421, 7
      %v423 = vsub.s32 1, %v422
      %v424 = vrot.slane %v409, %v423
      %426 = vbcast.lane.b32.xlu0 %v424, 256
      %v427 = vpop.permute.xlu0 %426
      %s429 = sor.u32 256, 8
      %430 = vbcast.lane.b32.xlu0 %v424, %s429
      %v431 = vpop.permute.xlu0 %430
      %v432 = vlaneseq
      %v433 = vshrl.u32 %v432, 7
      %v434 = vsub.s32 2, %v433
      %v435 = vrot.slane %v409, %v434
      %437 = vbcast.lane.b32.xlu0 %v435, 256
      %v438 = vpop.permute.xlu0 %437
      %s440 = sor.u32 256, 8
      %441 = vbcast.lane.b32.xlu0 %v435, %s440
      %v442 = vpop.permute.xlu0 %441
      %v443 = vlaneseq
      %v444 = vshrl.u32 %v443, 7
      %v445 = vsub.s32 3, %v444
      %v446 = vrot.slane %v409, %v445
      %448 = vbcast.lane.b32.xlu0 %v446, 256
      %v449 = vpop.permute.xlu0 %448
      %s451 = sor.u32 256, 8
      %452 = vbcast.lane.b32.xlu0 %v446, %s451
      %v453 = vpop.permute.xlu0 %452
      %v454 = vlaneseq
      %v455 = vshrl.u32 %v454, 7
      %v456 = vsub.s32 4, %v455
      %v457 = vrot.slane %v409, %v456
      %459 = vbcast.lane.b32.xlu0 %v457, 256
      %v460 = vpop.permute.xlu0 %459
      %s462 = sor.u32 256, 8
      %463 = vbcast.lane.b32.xlu0 %v457, %s462
      %v464 = vpop.permute.xlu0 %463
      %v465 = vlaneseq
      %v466 = vshrl.u32 %v465, 7
      %v467 = vsub.s32 5, %v466
      %v468 = vrot.slane %v409, %v467
      %470 = vbcast.lane.b32.xlu0 %v468, 256
      %v471 = vpop.permute.xlu0 %470
      %s473 = sor.u32 256, 8
      %474 = vbcast.lane.b32.xlu0 %v468, %s473
      %v475 = vpop.permute.xlu0 %474
      %v476 = vlaneseq
      %v477 = vshrl.u32 %v476, 7
      %v478 = vsub.s32 6, %v477
      %v479 = vrot.slane %v409, %v478
      %481 = vbcast.lane.b32.xlu0 %v479, 256
      %v482 = vpop.permute.xlu0 %481
      %s484 = sor.u32 256, 8
      %485 = vbcast.lane.b32.xlu0 %v479, %s484
      %v486 = vpop.permute.xlu0 %485
      %v487 = vlaneseq
      %v488 = vshrl.u32 %v487, 7
      %v489 = vsub.s32 7, %v488
      %v490 = vrot.slane %v409, %v489
      %492 = vbcast.lane.b32.xlu0 %v490, 256
      %v493 = vpop.permute.xlu0 %492
      %s495 = sor.u32 256, 8
      %496 = vbcast.lane.b32.xlu0 %v490, %s495
      %v497 = vpop.permute.xlu0 %496
      %v498 = vsel %vm315, 1, 0
      %v499 = vcvt.s32.f32 %v498
      %v500 = vlaneseq
      %v501 = vshrl.u32 %v500, 7
      %v502 = vsub.s32 0, %v501
      %v503 = vrot.slane %v499, %v502
      %505 = vbcast.lane.b32.xlu0 %v503, 256
      %v506 = vpop.permute.xlu0 %505
      %s508 = sor.u32 256, 8
      %509 = vbcast.lane.b32.xlu0 %v503, %s508
      %v510 = vpop.permute.xlu0 %509
      %v511 = vlaneseq
      %v512 = vshrl.u32 %v511, 7
      %v513 = vsub.s32 1, %v512
      %v514 = vrot.slane %v499, %v513
      %516 = vbcast.lane.b32.xlu0 %v514, 256
      %v517 = vpop.permute.xlu0 %516
      %s519 = sor.u32 256, 8
      %520 = vbcast.lane.b32.xlu0 %v514, %s519
      %v521 = vpop.permute.xlu0 %520
      %v522 = vlaneseq
      %v523 = vshrl.u32 %v522, 7
      %v524 = vsub.s32 2, %v523
      %v525 = vrot.slane %v499, %v524
      %527 = vbcast.lane.b32.xlu0 %v525, 256
      %v528 = vpop.permute.xlu0 %527
      %s530 = sor.u32 256, 8
      %531 = vbcast.lane.b32.xlu0 %v525, %s530
      %v532 = vpop.permute.xlu0 %531
      %v533 = vlaneseq
      %v534 = vshrl.u32 %v533, 7
      %v535 = vsub.s32 3, %v534
      %v536 = vrot.slane %v499, %v535
      %538 = vbcast.lane.b32.xlu0 %v536, 256
      %v539 = vpop.permute.xlu0 %538
      %s541 = sor.u32 256, 8
      %542 = vbcast.lane.b32.xlu0 %v536, %s541
      %v543 = vpop.permute.xlu0 %542
      %v544 = vlaneseq
      %v545 = vshrl.u32 %v544, 7
      %v546 = vsub.s32 4, %v545
      %v547 = vrot.slane %v499, %v546
      %549 = vbcast.lane.b32.xlu0 %v547, 256
      %v550 = vpop.permute.xlu0 %549
      %s552 = sor.u32 256, 8
      %553 = vbcast.lane.b32.xlu0 %v547, %s552
      %v554 = vpop.permute.xlu0 %553
      %v555 = vlaneseq
      %v556 = vshrl.u32 %v555, 7
      %v557 = vsub.s32 5, %v556
      %v558 = vrot.slane %v499, %v557
      %560 = vbcast.lane.b32.xlu0 %v558, 256
      %v561 = vpop.permute.xlu0 %560
      %s563 = sor.u32 256, 8
      %564 = vbcast.lane.b32.xlu0 %v558, %s563
      %v565 = vpop.permute.xlu0 %564
      %v566 = vlaneseq
      %v567 = vshrl.u32 %v566, 7
      %v568 = vsub.s32 6, %v567
      %v569 = vrot.slane %v499, %v568
      %571 = vbcast.lane.b32.xlu0 %v569, 256
      %v572 = vpop.permute.xlu0 %571
      %s574 = sor.u32 256, 8
      %575 = vbcast.lane.b32.xlu0 %v569, %s574
      %v576 = vpop.permute.xlu0 %575
      %v577 = vlaneseq
      %v578 = vshrl.u32 %v577, 7
      %v579 = vsub.s32 7, %v578
      %v580 = vrot.slane %v499, %v579
      %582 = vbcast.lane.b32.xlu0 %v580, 256
      %v583 = vpop.permute.xlu0 %582
      %s585 = sor.u32 256, 8
      %586 = vbcast.lane.b32.xlu0 %v580, %s585
      %v587 = vpop.permute.xlu0 %586
      %v588 = vmul.f32 %v273, %v326
      %v589 = vmul.f32 %v274, %v330
      %v590 = vmul.f32 %v275, %v337
      %v591 = vmul.f32 %v276, %v341
      %v592 = vmul.f32 %v277, %v348
      %v593 = vmul.f32 %v278, %v352
      %v594 = vmul.f32 %v279, %v359
      %v595 = vmul.f32 %v280, %v363
      %v596 = vmul.f32 %v281, %v370
      %v597 = vmul.f32 %v282, %v374
      %v598 = vmul.f32 %v283, %v381
      %v599 = vmul.f32 %v284, %v385
      %v600 = vmul.f32 %v285, %v392
      %v601 = vmul.f32 %v286, %v396
      %v602 = vmul.f32 %v287, %v403
      %v603 = vmul.f32 %v288, %v407
      %vm604 = vcmask 261120
      %v605 = vsel %vm604, %v588, -inf
      %v606 = vsel %vm604, %v589, -inf
      %v607 = vmax.f32 %v605, %v606
      %v608 = vrot.slane %v607, 4
      %v609 = vmax.f32 %v607, %v608
      %v610 = vrot.slane %v609, 2
      %v611 = vmax.f32 %v609, %v610
      %v612 = vrot.slane %v611, 1
      %v613 = vmax.f32 %v611, %v612
      %v614 = vsel %vm604, %v590, -inf
      %v615 = vsel %vm604, %v591, -inf
      %v616 = vmax.f32 %v614, %v615
      %v617 = vrot.slane %v616, 4
      %v618 = vmax.f32 %v616, %v617
      %v619 = vrot.slane %v618, 2
      %v620 = vmax.f32 %v618, %v619
      %v621 = vrot.slane %v620, 1
      %v622 = vmax.f32 %v620, %v621
      %v623 = vsel %vm604, %v592, -inf
      %v624 = vsel %vm604, %v593, -inf
      %v625 = vmax.f32 %v623, %v624
      %v626 = vrot.slane %v625, 4
      %v627 = vmax.f32 %v625, %v626
      %v628 = vrot.slane %v627, 2
      %v629 = vmax.f32 %v627, %v628
      %v630 = vrot.slane %v629, 1
      %v631 = vmax.f32 %v629, %v630
      %v632 = vsel %vm604, %v594, -inf
      %v633 = vsel %vm604, %v595, -inf
      %v634 = vmax.f32 %v632, %v633
      %v635 = vrot.slane %v634, 4
      %v636 = vmax.f32 %v634, %v635
      %v637 = vrot.slane %v636, 2
      %v638 = vmax.f32 %v636, %v637
      %v639 = vrot.slane %v638, 1
      %v640 = vmax.f32 %v638, %v639
      %v641 = vsel %vm604, %v596, -inf
      %v642 = vsel %vm604, %v597, -inf
      %v643 = vmax.f32 %v641, %v642
      %v644 = vrot.slane %v643, 4
      %v645 = vmax.f32 %v643, %v644
      %v646 = vrot.slane %v645, 2
      %v647 = vmax.f32 %v645, %v646
      %v648 = vrot.slane %v647, 1
      %v649 = vmax.f32 %v647, %v648
      %v650 = vsel %vm604, %v598, -inf
      %v651 = vsel %vm604, %v599, -inf
      %v652 = vmax.f32 %v650, %v651
      %v653 = vrot.slane %v652, 4
      %v654 = vmax.f32 %v652, %v653
      %v655 = vrot.slane %v654, 2
      %v656 = vmax.f32 %v654, %v655
      %v657 = vrot.slane %v656, 1
      %v658 = vmax.f32 %v656, %v657
      %v659 = vsel %vm604, %v600, -inf
      %v660 = vsel %vm604, %v601, -inf
      %v661 = vmax.f32 %v659, %v660
      %v662 = vrot.slane %v661, 4
      %v663 = vmax.f32 %v661, %v662
      %v664 = vrot.slane %v663, 2
      %v665 = vmax.f32 %v663, %v664
      %v666 = vrot.slane %v665, 1
      %v667 = vmax.f32 %v665, %v666
      %v668 = vsel %vm604, %v602, -inf
      %v669 = vsel %vm604, %v603, -inf
      %v670 = vmax.f32 %v668, %v669
      %v671 = vrot.slane %v670, 4
      %v672 = vmax.f32 %v670, %v671
      %v673 = vrot.slane %v672, 2
      %v674 = vmax.f32 %v672, %v673
      %v675 = vrot.slane %v674, 1
      %v676 = vmax.f32 %v674, %v675
      %v677 = vmul.f32 %v588, %v416
      %v678 = vmul.f32 %v589, %v420
      %v679 = vmul.f32 %v590, %v427
      %v680 = vmul.f32 %v591, %v431
      %v681 = vmul.f32 %v592, %v438
      %v682 = vmul.f32 %v593, %v442
      %v683 = vmul.f32 %v594, %v449
      %v684 = vmul.f32 %v595, %v453
      %v685 = vmul.f32 %v596, %v460
      %v686 = vmul.f32 %v597, %v464
      %v687 = vmul.f32 %v598, %v471
      %v688 = vmul.f32 %v599, %v475
      %v689 = vmul.f32 %v600, %v482
      %v690 = vmul.f32 %v601, %v486
      %v691 = vmul.f32 %v602, %v493
      %v692 = vmul.f32 %v603, %v497
      %v693 = vsel %vm604, %v677, -inf
      %v694 = vsel %vm604, %v678, -inf
      %v695 = vmax.f32 %v693, %v694
      %v696 = vrot.slane %v695, 4
      %v697 = vmax.f32 %v695, %v696
      %v698 = vrot.slane %v697, 2
      %v699 = vmax.f32 %v697, %v698
      %v700 = vrot.slane %v699, 1
      %v701 = vmax.f32 %v699, %v700
      %v702 = vsel %vm604, %v679, -inf
      %v703 = vsel %vm604, %v680, -inf
      %v704 = vmax.f32 %v702, %v703
      %v705 = vrot.slane %v704, 4
      %v706 = vmax.f32 %v704, %v705
      %v707 = vrot.slane %v706, 2
      %v708 = vmax.f32 %v706, %v707
      %v709 = vrot.slane %v708, 1
      %v710 = vmax.f32 %v708, %v709
      %v711 = vsel %vm604, %v681, -inf
      %v712 = vsel %vm604, %v682, -inf
      %v713 = vmax.f32 %v711, %v712
      %v714 = vrot.slane %v713, 4
      %v715 = vmax.f32 %v713, %v714
      %v716 = vrot.slane %v715, 2
      %v717 = vmax.f32 %v715, %v716
      %v718 = vrot.slane %v717, 1
      %v719 = vmax.f32 %v717, %v718
      %v720 = vsel %vm604, %v683, -inf
      %v721 = vsel %vm604, %v684, -inf
      %v722 = vmax.f32 %v720, %v721
      %v723 = vrot.slane %v722, 4
      %v724 = vmax.f32 %v722, %v723
      %v725 = vrot.slane %v724, 2
      %v726 = vmax.f32 %v724, %v725
      %v727 = vrot.slane %v726, 1
      %v728 = vmax.f32 %v726, %v727
      %v729 = vsel %vm604, %v685, -inf
      %v730 = vsel %vm604, %v686, -inf
      %v731 = vmax.f32 %v729, %v730
      %v732 = vrot.slane %v731, 4
      %v733 = vmax.f32 %v731, %v732
      %v734 = vrot.slane %v733, 2
      %v735 = vmax.f32 %v733, %v734
      %v736 = vrot.slane %v735, 1
      %v737 = vmax.f32 %v735, %v736
      %v738 = vsel %vm604, %v687, -inf
      %v739 = vsel %vm604, %v688, -inf
      %v740 = vmax.f32 %v738, %v739
      %v741 = vrot.slane %v740, 4
      %v742 = vmax.f32 %v740, %v741
      %v743 = vrot.slane %v742, 2
      %v744 = vmax.f32 %v742, %v743
      %v745 = vrot.slane %v744, 1
      %v746 = vmax.f32 %v744, %v745
      %v747 = vsel %vm604, %v689, -inf
      %v748 = vsel %vm604, %v690, -inf
      %v749 = vmax.f32 %v747, %v748
      %v750 = vrot.slane %v749, 4
      %v751 = vmax.f32 %v749, %v750
      %v752 = vrot.slane %v751, 2
      %v753 = vmax.f32 %v751, %v752
      %v754 = vrot.slane %v753, 1
      %v755 = vmax.f32 %v753, %v754
      %v756 = vsel %vm604, %v691, -inf
      %v757 = vsel %vm604, %v692, -inf
      %v758 = vmax.f32 %v756, %v757
      %v759 = vrot.slane %v758, 4
      %v760 = vmax.f32 %v758, %v759
      %v761 = vrot.slane %v760, 2
      %v762 = vmax.f32 %v760, %v761
      %v763 = vrot.slane %v762, 1
      %v764 = vmax.f32 %v762, %v763
      %v765 = vmul.f32 %v588, %v506
      %v766 = vmul.f32 %v589, %v510
      %v767 = vmul.f32 %v590, %v517
      %v768 = vmul.f32 %v591, %v521
      %v769 = vmul.f32 %v592, %v528
      %v770 = vmul.f32 %v593, %v532
      %v771 = vmul.f32 %v594, %v539
      %v772 = vmul.f32 %v595, %v543
      %v773 = vmul.f32 %v596, %v550
      %v774 = vmul.f32 %v597, %v554
      %v775 = vmul.f32 %v598, %v561
      %v776 = vmul.f32 %v599, %v565
      %v777 = vmul.f32 %v600, %v572
      %v778 = vmul.f32 %v601, %v576
      %v779 = vmul.f32 %v602, %v583
      %v780 = vmul.f32 %v603, %v587
      %v781 = vsel %vm604, %v765, -inf
      %v782 = vsel %vm604, %v766, -inf
      %v783 = vmax.f32 %v781, %v782
      %v784 = vrot.slane %v783, 4
      %v785 = vmax.f32 %v783, %v784
      %v786 = vrot.slane %v785, 2
      %v787 = vmax.f32 %v785, %v786
      %v788 = vrot.slane %v787, 1
      %v789 = vmax.f32 %v787, %v788
      %v790 = vsel %vm604, %v767, -inf
      %v791 = vsel %vm604, %v768, -inf
      %v792 = vmax.f32 %v790, %v791
      %v793 = vrot.slane %v792, 4
      %v794 = vmax.f32 %v792, %v793
      %v795 = vrot.slane %v794, 2
      %v796 = vmax.f32 %v794, %v795
      %v797 = vrot.slane %v796, 1
      %v798 = vmax.f32 %v796, %v797
      %v799 = vsel %vm604, %v769, -inf
      %v800 = vsel %vm604, %v770, -inf
      %v801 = vmax.f32 %v799, %v800
      %v802 = vrot.slane %v801, 4
      %v803 = vmax.f32 %v801, %v802
      %v804 = vrot.slane %v803, 2
      %v805 = vmax.f32 %v803, %v804
      %v806 = vrot.slane %v805, 1
      %v807 = vmax.f32 %v805, %v806
      %v808 = vsel %vm604, %v771, -inf
      %v809 = vsel %vm604, %v772, -inf
      %v810 = vmax.f32 %v808, %v809
      %v811 = vrot.slane %v810, 4
      %v812 = vmax.f32 %v810, %v811
      %v813 = vrot.slane %v812, 2
      %v814 = vmax.f32 %v812, %v813
      %v815 = vrot.slane %v814, 1
      %v816 = vmax.f32 %v814, %v815
      %v817 = vsel %vm604, %v773, -inf
      %v818 = vsel %vm604, %v774, -inf
      %v819 = vmax.f32 %v817, %v818
      %v820 = vrot.slane %v819, 4
      %v821 = vmax.f32 %v819, %v820
      %v822 = vrot.slane %v821, 2
      %v823 = vmax.f32 %v821, %v822
      %v824 = vrot.slane %v823, 1
      %v825 = vmax.f32 %v823, %v824
      %v826 = vsel %vm604, %v775, -inf
      %v827 = vsel %vm604, %v776, -inf
      %v828 = vmax.f32 %v826, %v827
      %v829 = vrot.slane %v828, 4
      %v830 = vmax.f32 %v828, %v829
      %v831 = vrot.slane %v830, 2
      %v832 = vmax.f32 %v830, %v831
      %v833 = vrot.slane %v832, 1
      %v834 = vmax.f32 %v832, %v833
      %v835 = vsel %vm604, %v777, -inf
      %v836 = vsel %vm604, %v778, -inf
      %v837 = vmax.f32 %v835, %v836
      %v838 = vrot.slane %v837, 4
      %v839 = vmax.f32 %v837, %v838
      %v840 = vrot.slane %v839, 2
      %v841 = vmax.f32 %v839, %v840
      %v842 = vrot.slane %v841, 1
      %v843 = vmax.f32 %v841, %v842
      %v844 = vsel %vm604, %v779, -inf
      %v845 = vsel %vm604, %v780, -inf
      %v846 = vmax.f32 %v844, %v845
      %v847 = vrot.slane %v846, 4
      %v848 = vmax.f32 %v846, %v847
      %v849 = vrot.slane %v848, 2
      %v850 = vmax.f32 %v848, %v849
      %v851 = vrot.slane %v850, 1
      %v852 = vmax.f32 %v850, %v851
      %v853 = vsub.f32 %v701, %v789
      %v854 = vsub.f32 %v710, %v798
      %v855 = vsub.f32 %v719, %v807
      %v856 = vsub.f32 %v728, %v816
      %v857 = vsub.f32 %v737, %v825
      %v858 = vsub.f32 %v746, %v834
      %v859 = vsub.f32 %v755, %v843
      %v860 = vsub.f32 %v764, %v852
      %v861 = vand.u32 2147483647, %v853
      %v862 = vand.u32 2147483647, %v854
      %v863 = vand.u32 2147483647, %v855
      %v864 = vand.u32 2147483647, %v856
      %v865 = vand.u32 2147483647, %v857
      %v866 = vand.u32 2147483647, %v858
      %v867 = vand.u32 2147483647, %v859
      %v868 = vand.u32 2147483647, %v860
      %v869 = vmul.f32 %v701, %v789
      %v870 = vmul.f32 %v710, %v798
      %v871 = vmul.f32 %v719, %v807
      %v872 = vmul.f32 %v728, %v816
      %v873 = vmul.f32 %v737, %v825
      %v874 = vmul.f32 %v746, %v834
      %v875 = vmul.f32 %v755, %v843
      %v876 = vmul.f32 %v764, %v852
      %v877 = vld [vmem:[%s3] sm:$0x1]
      %v878 = vld [vmem:[%s2] sm:$0xff]
      %v879 = vld [vmem:[%s2 + $0x8] sm:$0xff]
      %v880 = vld [vmem:[%s2 + $0x10] sm:$0xff]
      %v881 = vld [vmem:[%s2 + $0x18] sm:$0xff]
      %vm890 = vcmask 1041409
      %v891 = vsel %vm890, %v622, %v613
      %vm892 = vcmask 1042434
      %v893 = vsel %vm892, %v631, %v891
      %vm894 = vcmask 1043459
      %v895 = vsel %vm894, %v640, %v893
      %vm896 = vcmask 1044484
      %v897 = vsel %vm896, %v649, %v895
      %vm898 = vcmask 1045509
      %v899 = vsel %vm898, %v658, %v897
      %vm900 = vcmask 1046534
      %v901 = vsel %vm900, %v667, %v899
      %vm902 = vcmask 1047559
      %v903 = vsel %vm902, %v676, %v901
      %v904 = vsel %vm604, %v903, 0
      %906 = vmatprep.subr.mxu0 0.0
      %907 = vmatpush1.msra.mxu0 0.0
      %908 = vmatprep.subr.mxu0 0.0
      %909 = vmatpush1.msra.mxu0 0.0
      %910 = vmatprep.subr.mxu0 0.0
      %911 = vmatpush1.msra.mxu0 0.0
      %912 = vmatprep.subr.mxu0 0.0
      %913 = vmatpush1.msra.mxu0 0.0
      %914 = vmatprep.subr.mxu0 0.0
      %915 = vmatpush1.msra.mxu0 0.0
      %916 = vmatprep.subr.mxu0 0.0
      %917 = vmatpush1.msra.mxu0 0.0
      %918 = vmatprep.subr.mxu0 0.0
      %919 = vmatpush1.msra.mxu0 0.0
      %920 = vmatprep.subr.mxu0 0.0
      %921 = vmatpush1.msra.mxu0 0.0
      %922 = vmatprep.subr.mxu0 0.0
      %923 = vmatpush1.msra.mxu0 0.0
      %924 = vmatprep.subr.mxu0 0.0
      %925 = vmatpush1.msra.mxu0 0.0
      %926 = vmatprep.subr.mxu0 0.0
      %927 = vmatpush1.msra.mxu0 0.0
      %928 = vmatprep.subr.mxu0 0.0
      %929 = vmatpush1.msra.mxu0 0.0
      %930 = vmatprep.subr.mxu0 0.0
      %931 = vmatpush1.msra.mxu0 %v881
      %932 = vmatprep.subr.mxu0 0.0
      %933 = vmatpush1.msra.mxu0 %v880
      %934 = vmatprep.subr.mxu0 0.0
      %935 = vmatpush1.msra.mxu0 %v879
      %936 = vmatprep.subr.mxu0 0.0
      %937 = vmatpush1.msra.mxu0 %v878
      %938 = vmatprep.subr.mxu0 0.0
      %939 = vmatpush2.msra.mxu0 0.0
      %940 = vmatprep.subr.mxu0 0.0
      %941 = vmatpush2.msra.mxu0 0.0
      %942 = vmatprep.subr.mxu0 0.0
      %943 = vmatpush2.msra.mxu0 0.0
      %944 = vmatprep.subr.mxu0 0.0
      %945 = vmatpush2.msra.mxu0 0.0
      %946 = vmatprep.subr.mxu0 0.0
      %947 = vmatpush2.msra.mxu0 0.0
      %948 = vmatprep.subr.mxu0 0.0
      %949 = vmatpush2.msra.mxu0 0.0
      %950 = vmatprep.subr.mxu0 0.0
      %951 = vmatpush2.msra.mxu0 0.0
      %952 = vmatprep.subr.mxu0 0.0
      %953 = vmatpush2.msra.mxu0 0.0
      %954 = vmatprep.subr.mxu0 0.0
      %955 = vmatpush2.msra.mxu0 0.0
      %956 = vmatprep.subr.mxu0 0.0
      %957 = vmatpush2.msra.mxu0 0.0
      %958 = vmatprep.subr.mxu0 0.0
      %959 = vmatpush2.msra.mxu0 0.0
      %960 = vmatprep.subr.mxu0 0.0
      %961 = vmatpush2.msra.mxu0 0.0
      %962 = vmatprep.subr.mxu0 0.0
      %963 = vmatpush2.msra.mxu0 0.0
      %964 = vmatprep.subr.mxu0 0.0
      %965 = vmatpush2.msra.mxu0 0.0
      %966 = vmatprep.subr.mxu0 0.0
      %967 = vmatpush2.msra.mxu0 0.0
      %968 = vmatprep.subr.mxu0 0.0
      %969 = vmatpush2.msra.mxu0 0.0
      %970 = vmatprep.mubr.f32.mxu0 0.0
      %971 = vmatmul.mubr.f32.gmra.mxu0 %v904
      %v972 = vpop.f32.mrf.mxu0
      %v973 = vadd.f32 0.0, %v972
      %v974 = vpop.f32.mrf.mxu0
      %975 = vdwg.mxu0
      %v977 = vlaneseq
      %v978 = vshrl.u32 %v977, 7
      %v979 = vsub.s32 0, %v978
      %v980 = vrot.slane %v877, %v979
      %v982 = vadd.f32 %v980, %v973
      %v983 = vld [vmem:[%s2 + $0x20] sm:$0xff]
      %v984 = vld [vmem:[%s2 + $0x28] sm:$0xff]
      %v985 = vld [vmem:[%s2 + $0x30] sm:$0xff]
      %v986 = vld [vmem:[%s2 + $0x38] sm:$0xff]
      %v995 = vsel %vm890, %v710, %v701
      %v996 = vsel %vm892, %v719, %v995
      %v997 = vsel %vm894, %v728, %v996
      %v998 = vsel %vm896, %v737, %v997
      %v999 = vsel %vm898, %v746, %v998
      %v1000 = vsel %vm900, %v755, %v999
      %v1001 = vsel %vm902, %v764, %v1000
      %v1002 = vsel %vm604, %v1001, 0
      %1004 = vmatprep.subr.mxu0 0.0
      %1005 = vmatpush1.msra.mxu0 0.0
      %1006 = vmatprep.subr.mxu0 0.0
      %1007 = vmatpush1.msra.mxu0 0.0
      %1008 = vmatprep.subr.mxu0 0.0
      %1009 = vmatpush1.msra.mxu0 0.0
      %1010 = vmatprep.subr.mxu0 0.0
      %1011 = vmatpush1.msra.mxu0 0.0
      %1012 = vmatprep.subr.mxu0 0.0
      %1013 = vmatpush1.msra.mxu0 0.0
      %1014 = vmatprep.subr.mxu0 0.0
      %1015 = vmatpush1.msra.mxu0 0.0
      %1016 = vmatprep.subr.mxu0 0.0
      %1017 = vmatpush1.msra.mxu0 0.0
      %1018 = vmatprep.subr.mxu0 0.0
      %1019 = vmatpush1.msra.mxu0 0.0
      %1020 = vmatprep.subr.mxu0 0.0
      %1021 = vmatpush1.msra.mxu0 0.0
      %1022 = vmatprep.subr.mxu0 0.0
      %1023 = vmatpush1.msra.mxu0 0.0
      %1024 = vmatprep.subr.mxu0 0.0
      %1025 = vmatpush1.msra.mxu0 0.0
      %1026 = vmatprep.subr.mxu0 0.0
      %1027 = vmatpush1.msra.mxu0 0.0
      %1028 = vmatprep.subr.mxu0 0.0
      %1029 = vmatpush1.msra.mxu0 %v986
      %1030 = vmatprep.subr.mxu0 0.0
      %1031 = vmatpush1.msra.mxu0 %v985
      %1032 = vmatprep.subr.mxu0 0.0
      %1033 = vmatpush1.msra.mxu0 %v984
      %1034 = vmatprep.subr.mxu0 0.0
      %1035 = vmatpush1.msra.mxu0 %v983
      %1036 = vmatprep.subr.mxu0 0.0
      %1037 = vmatpush2.msra.mxu0 0.0
      %1038 = vmatprep.subr.mxu0 0.0
      %1039 = vmatpush2.msra.mxu0 0.0
      %1040 = vmatprep.subr.mxu0 0.0
      %1041 = vmatpush2.msra.mxu0 0.0
      %1042 = vmatprep.subr.mxu0 0.0
      %1043 = vmatpush2.msra.mxu0 0.0
      %1044 = vmatprep.subr.mxu0 0.0
      %1045 = vmatpush2.msra.mxu0 0.0
      %1046 = vmatprep.subr.mxu0 0.0
      %1047 = vmatpush2.msra.mxu0 0.0
      %1048 = vmatprep.subr.mxu0 0.0
      %1049 = vmatpush2.msra.mxu0 0.0
      %1050 = vmatprep.subr.mxu0 0.0
      %1051 = vmatpush2.msra.mxu0 0.0
      %1052 = vmatprep.subr.mxu0 0.0
      %1053 = vmatpush2.msra.mxu0 0.0
      %1054 = vmatprep.subr.mxu0 0.0
      %1055 = vmatpush2.msra.mxu0 0.0
      %1056 = vmatprep.subr.mxu0 0.0
      %1057 = vmatpush2.msra.mxu0 0.0
      %1058 = vmatprep.subr.mxu0 0.0
      %1059 = vmatpush2.msra.mxu0 0.0
      %1060 = vmatprep.subr.mxu0 0.0
      %1061 = vmatpush2.msra.mxu0 0.0
      %1062 = vmatprep.subr.mxu0 0.0
      %1063 = vmatpush2.msra.mxu0 0.0
      %1064 = vmatprep.subr.mxu0 0.0
      %1065 = vmatpush2.msra.mxu0 0.0
      %1066 = vmatprep.subr.mxu0 0.0
      %1067 = vmatpush2.msra.mxu0 0.0
      %1068 = vmatprep.mubr.f32.mxu0 0.0
      %1069 = vmatmul.mubr.f32.gmra.mxu0 %v1002
      %v1070 = vpop.f32.mrf.mxu0
      %v1071 = vadd.f32 0.0, %v1070
      %v1072 = vpop.f32.mrf.mxu0
      %1073 = vdwg.mxu0
      %v1074 = vadd.f32 %v982, %v1071
      %v1075 = vld [vmem:[%s2 + $0x40] sm:$0xff]
      %v1076 = vld [vmem:[%s2 + $0x48] sm:$0xff]
      %v1077 = vld [vmem:[%s2 + $0x50] sm:$0xff]
      %v1078 = vld [vmem:[%s2 + $0x58] sm:$0xff]
      %v1087 = vsel %vm890, %v798, %v789
      %v1088 = vsel %vm892, %v807, %v1087
      %v1089 = vsel %vm894, %v816, %v1088
      %v1090 = vsel %vm896, %v825, %v1089
      %v1091 = vsel %vm898, %v834, %v1090
      %v1092 = vsel %vm900, %v843, %v1091
      %v1093 = vsel %vm902, %v852, %v1092
      %v1094 = vsel %vm604, %v1093, 0
      %1096 = vmatprep.subr.mxu0 0.0
      %1097 = vmatpush1.msra.mxu0 0.0
      %1098 = vmatprep.subr.mxu0 0.0
      %1099 = vmatpush1.msra.mxu0 0.0
      %1100 = vmatprep.subr.mxu0 0.0
      %1101 = vmatpush1.msra.mxu0 0.0
      %1102 = vmatprep.subr.mxu0 0.0
      %1103 = vmatpush1.msra.mxu0 0.0
      %1104 = vmatprep.subr.mxu0 0.0
      %1105 = vmatpush1.msra.mxu0 0.0
      %1106 = vmatprep.subr.mxu0 0.0
      %1107 = vmatpush1.msra.mxu0 0.0
      %1108 = vmatprep.subr.mxu0 0.0
      %1109 = vmatpush1.msra.mxu0 0.0
      %1110 = vmatprep.subr.mxu0 0.0
      %1111 = vmatpush1.msra.mxu0 0.0
      %1112 = vmatprep.subr.mxu0 0.0
      %1113 = vmatpush1.msra.mxu0 0.0
      %1114 = vmatprep.subr.mxu0 0.0
      %1115 = vmatpush1.msra.mxu0 0.0
      %1116 = vmatprep.subr.mxu0 0.0
      %1117 = vmatpush1.msra.mxu0 0.0
      %1118 = vmatprep.subr.mxu0 0.0
      %1119 = vmatpush1.msra.mxu0 0.0
      %1120 = vmatprep.subr.mxu0 0.0
      %1121 = vmatpush1.msra.mxu0 %v1078
      %1122 = vmatprep.subr.mxu0 0.0
      %1123 = vmatpush1.msra.mxu0 %v1077
      %1124 = vmatprep.subr.mxu0 0.0
      %1125 = vmatpush1.msra.mxu0 %v1076
      %1126 = vmatprep.subr.mxu0 0.0
      %1127 = vmatpush1.msra.mxu0 %v1075
      %1128 = vmatprep.subr.mxu0 0.0
      %1129 = vmatpush2.msra.mxu0 0.0
      %1130 = vmatprep.subr.mxu0 0.0
      %1131 = vmatpush2.msra.mxu0 0.0
      %1132 = vmatprep.subr.mxu0 0.0
      %1133 = vmatpush2.msra.mxu0 0.0
      %1134 = vmatprep.subr.mxu0 0.0
      %1135 = vmatpush2.msra.mxu0 0.0
      %1136 = vmatprep.subr.mxu0 0.0
      %1137 = vmatpush2.msra.mxu0 0.0
      %1138 = vmatprep.subr.mxu0 0.0
      %1139 = vmatpush2.msra.mxu0 0.0
      %1140 = vmatprep.subr.mxu0 0.0
      %1141 = vmatpush2.msra.mxu0 0.0
      %1142 = vmatprep.subr.mxu0 0.0
      %1143 = vmatpush2.msra.mxu0 0.0
      %1144 = vmatprep.subr.mxu0 0.0
      %1145 = vmatpush2.msra.mxu0 0.0
      %1146 = vmatprep.subr.mxu0 0.0
      %1147 = vmatpush2.msra.mxu0 0.0
      %1148 = vmatprep.subr.mxu0 0.0
      %1149 = vmatpush2.msra.mxu0 0.0
      %1150 = vmatprep.subr.mxu0 0.0
      %1151 = vmatpush2.msra.mxu0 0.0
      %1152 = vmatprep.subr.mxu0 0.0
      %1153 = vmatpush2.msra.mxu0 0.0
      %1154 = vmatprep.subr.mxu0 0.0
      %1155 = vmatpush2.msra.mxu0 0.0
      %1156 = vmatprep.subr.mxu0 0.0
      %1157 = vmatpush2.msra.mxu0 0.0
      %1158 = vmatprep.subr.mxu0 0.0
      %1159 = vmatpush2.msra.mxu0 0.0
      %1160 = vmatprep.mubr.f32.mxu0 0.0
      %1161 = vmatmul.mubr.f32.gmra.mxu0 %v1094
      %v1162 = vpop.f32.mrf.mxu0
      %v1163 = vadd.f32 0.0, %v1162
      %v1164 = vpop.f32.mrf.mxu0
      %1165 = vdwg.mxu0
      %v1166 = vadd.f32 %v1074, %v1163
      %v1167 = vld [vmem:[%s2 + $0x60] sm:$0xff]
      %v1168 = vld [vmem:[%s2 + $0x68] sm:$0xff]
      %v1169 = vld [vmem:[%s2 + $0x70] sm:$0xff]
      %v1170 = vld [vmem:[%s2 + $0x78] sm:$0xff]
      %v1179 = vsel %vm890, %v862, %v861
      %v1180 = vsel %vm892, %v863, %v1179
      %v1181 = vsel %vm894, %v864, %v1180
      %v1182 = vsel %vm896, %v865, %v1181
      %v1183 = vsel %vm898, %v866, %v1182
      %v1184 = vsel %vm900, %v867, %v1183
      %v1185 = vsel %vm902, %v868, %v1184
      %v1186 = vsel %vm604, %v1185, 0
      %1188 = vmatprep.subr.mxu0 0.0
      %1189 = vmatpush1.msra.mxu0 0.0
      %1190 = vmatprep.subr.mxu0 0.0
      %1191 = vmatpush1.msra.mxu0 0.0
      %1192 = vmatprep.subr.mxu0 0.0
      %1193 = vmatpush1.msra.mxu0 0.0
      %1194 = vmatprep.subr.mxu0 0.0
      %1195 = vmatpush1.msra.mxu0 0.0
      %1196 = vmatprep.subr.mxu0 0.0
      %1197 = vmatpush1.msra.mxu0 0.0
      %1198 = vmatprep.subr.mxu0 0.0
      %1199 = vmatpush1.msra.mxu0 0.0
      %1200 = vmatprep.subr.mxu0 0.0
      %1201 = vmatpush1.msra.mxu0 0.0
      %1202 = vmatprep.subr.mxu0 0.0
      %1203 = vmatpush1.msra.mxu0 0.0
      %1204 = vmatprep.subr.mxu0 0.0
      %1205 = vmatpush1.msra.mxu0 0.0
      %1206 = vmatprep.subr.mxu0 0.0
      %1207 = vmatpush1.msra.mxu0 0.0
      %1208 = vmatprep.subr.mxu0 0.0
      %1209 = vmatpush1.msra.mxu0 0.0
      %1210 = vmatprep.subr.mxu0 0.0
      %1211 = vmatpush1.msra.mxu0 0.0
      %1212 = vmatprep.subr.mxu0 0.0
      %1213 = vmatpush1.msra.mxu0 %v1170
      %1214 = vmatprep.subr.mxu0 0.0
      %1215 = vmatpush1.msra.mxu0 %v1169
      %1216 = vmatprep.subr.mxu0 0.0
      %1217 = vmatpush1.msra.mxu0 %v1168
      %1218 = vmatprep.subr.mxu0 0.0
      %1219 = vmatpush1.msra.mxu0 %v1167
      %1220 = vmatprep.subr.mxu0 0.0
      %1221 = vmatpush2.msra.mxu0 0.0
      %1222 = vmatprep.subr.mxu0 0.0
      %1223 = vmatpush2.msra.mxu0 0.0
      %1224 = vmatprep.subr.mxu0 0.0
      %1225 = vmatpush2.msra.mxu0 0.0
      %1226 = vmatprep.subr.mxu0 0.0
      %1227 = vmatpush2.msra.mxu0 0.0
      %1228 = vmatprep.subr.mxu0 0.0
      %1229 = vmatpush2.msra.mxu0 0.0
      %1230 = vmatprep.subr.mxu0 0.0
      %1231 = vmatpush2.msra.mxu0 0.0
      %1232 = vmatprep.subr.mxu0 0.0
      %1233 = vmatpush2.msra.mxu0 0.0
      %1234 = vmatprep.subr.mxu0 0.0
      %1235 = vmatpush2.msra.mxu0 0.0
      %1236 = vmatprep.subr.mxu0 0.0
      %1237 = vmatpush2.msra.mxu0 0.0
      %1238 = vmatprep.subr.mxu0 0.0
      %1239 = vmatpush2.msra.mxu0 0.0
      %1240 = vmatprep.subr.mxu0 0.0
      %1241 = vmatpush2.msra.mxu0 0.0
      %1242 = vmatprep.subr.mxu0 0.0
      %1243 = vmatpush2.msra.mxu0 0.0
      %1244 = vmatprep.subr.mxu0 0.0
      %1245 = vmatpush2.msra.mxu0 0.0
      %1246 = vmatprep.subr.mxu0 0.0
      %1247 = vmatpush2.msra.mxu0 0.0
      %1248 = vmatprep.subr.mxu0 0.0
      %1249 = vmatpush2.msra.mxu0 0.0
      %1250 = vmatprep.subr.mxu0 0.0
      %1251 = vmatpush2.msra.mxu0 0.0
      %1252 = vmatprep.mubr.f32.mxu0 0.0
      %1253 = vmatmul.mubr.f32.gmra.mxu0 %v1186
      %v1254 = vpop.f32.mrf.mxu0
      %v1255 = vadd.f32 0.0, %v1254
      %v1256 = vpop.f32.mrf.mxu0
      %1257 = vdwg.mxu0
      %v1258 = vadd.f32 %v1166, %v1255
      %v1259 = vld [vmem:[%s2 + $0x80] sm:$0xff]
      %v1260 = vld [vmem:[%s2 + $0x88] sm:$0xff]
      %v1261 = vld [vmem:[%s2 + $0x90] sm:$0xff]
      %v1262 = vld [vmem:[%s2 + $0x98] sm:$0xff]
      %v1271 = vsel %vm890, %v870, %v869
      %v1272 = vsel %vm892, %v871, %v1271
      %v1273 = vsel %vm894, %v872, %v1272
      %v1274 = vsel %vm896, %v873, %v1273
      %v1275 = vsel %vm898, %v874, %v1274
      %v1276 = vsel %vm900, %v875, %v1275
      %v1277 = vsel %vm902, %v876, %v1276
      %v1278 = vsel %vm604, %v1277, 0
      %1280 = vmatprep.subr.mxu0 0.0
      %1281 = vmatpush1.msra.mxu0 0.0
      %1282 = vmatprep.subr.mxu0 0.0
      %1283 = vmatpush1.msra.mxu0 0.0
      %1284 = vmatprep.subr.mxu0 0.0
      %1285 = vmatpush1.msra.mxu0 0.0
      %1286 = vmatprep.subr.mxu0 0.0
      %1287 = vmatpush1.msra.mxu0 0.0
      %1288 = vmatprep.subr.mxu0 0.0
      %1289 = vmatpush1.msra.mxu0 0.0
      %1290 = vmatprep.subr.mxu0 0.0
      %1291 = vmatpush1.msra.mxu0 0.0
      %1292 = vmatprep.subr.mxu0 0.0
      %1293 = vmatpush1.msra.mxu0 0.0
      %1294 = vmatprep.subr.mxu0 0.0
      %1295 = vmatpush1.msra.mxu0 0.0
      %1296 = vmatprep.subr.mxu0 0.0
      %1297 = vmatpush1.msra.mxu0 0.0
      %1298 = vmatprep.subr.mxu0 0.0
      %1299 = vmatpush1.msra.mxu0 0.0
      %1300 = vmatprep.subr.mxu0 0.0
      %1301 = vmatpush1.msra.mxu0 0.0
      %1302 = vmatprep.subr.mxu0 0.0
      %1303 = vmatpush1.msra.mxu0 0.0
      %1304 = vmatprep.subr.mxu0 0.0
      %1305 = vmatpush1.msra.mxu0 %v1262
      %1306 = vmatprep.subr.mxu0 0.0
      %1307 = vmatpush1.msra.mxu0 %v1261
      %1308 = vmatprep.subr.mxu0 0.0
      %1309 = vmatpush1.msra.mxu0 %v1260
      %1310 = vmatprep.subr.mxu0 0.0
      %1311 = vmatpush1.msra.mxu0 %v1259
      %1312 = vmatprep.subr.mxu0 0.0
      %1313 = vmatpush2.msra.mxu0 0.0
      %1314 = vmatprep.subr.mxu0 0.0
      %1315 = vmatpush2.msra.mxu0 0.0
      %1316 = vmatprep.subr.mxu0 0.0
      %1317 = vmatpush2.msra.mxu0 0.0
      %1318 = vmatprep.subr.mxu0 0.0
      %1319 = vmatpush2.msra.mxu0 0.0
      %1320 = vmatprep.subr.mxu0 0.0
      %1321 = vmatpush2.msra.mxu0 0.0
      %1322 = vmatprep.subr.mxu0 0.0
      %1323 = vmatpush2.msra.mxu0 0.0
      %1324 = vmatprep.subr.mxu0 0.0
      %1325 = vmatpush2.msra.mxu0 0.0
      %1326 = vmatprep.subr.mxu0 0.0
      %1327 = vmatpush2.msra.mxu0 0.0
      %1328 = vmatprep.subr.mxu0 0.0
      %1329 = vmatpush2.msra.mxu0 0.0
      %1330 = vmatprep.subr.mxu0 0.0
      %1331 = vmatpush2.msra.mxu0 0.0
      %1332 = vmatprep.subr.mxu0 0.0
      %1333 = vmatpush2.msra.mxu0 0.0
      %1334 = vmatprep.subr.mxu0 0.0
      %1335 = vmatpush2.msra.mxu0 0.0
      %1336 = vmatprep.subr.mxu0 0.0
      %1337 = vmatpush2.msra.mxu0 0.0
      %1338 = vmatprep.subr.mxu0 0.0
      %1339 = vmatpush2.msra.mxu0 0.0
      %1340 = vmatprep.subr.mxu0 0.0
      %1341 = vmatpush2.msra.mxu0 0.0
      %1342 = vmatprep.subr.mxu0 0.0
      %1343 = vmatpush2.msra.mxu0 0.0
      %1344 = vmatprep.mubr.f32.mxu0 0.0
      %1345 = vmatmul.mubr.f32.gmra.mxu0 %v1278
      %v1346 = vpop.f32.mrf.mxu0
      %v1347 = vadd.f32 0.0, %v1346
      %v1348 = vpop.f32.mrf.mxu0
      %1349 = vdwg.mxu0
      %v1350 = vadd.f32 %v1258, %v1347
      %v1351 = vmax.f32 %v1350, 0.0
      %v1352 = vld [vmem:[%s4] sm:$0xff]
      %v1353 = vld [vmem:[%s4 + $0x8] sm:$0xff]
      %v1354 = vld [vmem:[%s4 + $0x10] sm:$0xff]
      %v1355 = vld [vmem:[%s4 + $0x18] sm:$0xff]
      %v1356 = vld [vmem:[%s4 + $0x20] sm:$0xff]
      %v1357 = vld [vmem:[%s4 + $0x28] sm:$0xff]
      %v1358 = vld [vmem:[%s4 + $0x30] sm:$0xff]
      %v1359 = vld [vmem:[%s4 + $0x38] sm:$0xff]
      %v1360 = vld [vmem:[%s5] sm:$0x1]
      %v1362 = vlaneseq
      %v1363 = vshrl.u32 %v1362, 7
      %v1364 = vsub.s32 0, %v1363
      %v1365 = vrot.slane %v1360, %v1364
      %vm1367 = vcmask 523264
      %v1369 = vsel %vm1367, %v1351, 0
      %1371 = vmatprep.subr.mxu0 0.0
      %1372 = vmatpush1.msra.mxu0 0.0
      %1373 = vmatprep.subr.mxu0 0.0
      %1374 = vmatpush1.msra.mxu0 0.0
      %1375 = vmatprep.subr.mxu0 0.0
      %1376 = vmatpush1.msra.mxu0 0.0
      %1377 = vmatprep.subr.mxu0 0.0
      %1378 = vmatpush1.msra.mxu0 0.0
      %1379 = vmatprep.subr.mxu0 0.0
      %1380 = vmatpush1.msra.mxu0 0.0
      %1381 = vmatprep.subr.mxu0 0.0
      %1382 = vmatpush1.msra.mxu0 0.0
      %1383 = vmatprep.subr.mxu0 0.0
      %1384 = vmatpush1.msra.mxu0 0.0
      %1385 = vmatprep.subr.mxu0 0.0
      %1386 = vmatpush1.msra.mxu0 0.0
      %1387 = vmatprep.subr.mxu0 0.0
      %1388 = vmatpush1.msra.mxu0 %v1359
      %1389 = vmatprep.subr.mxu0 0.0
      %1390 = vmatpush1.msra.mxu0 %v1358
      %1391 = vmatprep.subr.mxu0 0.0
      %1392 = vmatpush1.msra.mxu0 %v1357
      %1393 = vmatprep.subr.mxu0 0.0
      %1394 = vmatpush1.msra.mxu0 %v1356
      %1395 = vmatprep.subr.mxu0 0.0
      %1396 = vmatpush1.msra.mxu0 %v1355
      %1397 = vmatprep.subr.mxu0 0.0
      %1398 = vmatpush1.msra.mxu0 %v1354
      %1399 = vmatprep.subr.mxu0 0.0
      %1400 = vmatpush1.msra.mxu0 %v1353
      %1401 = vmatprep.subr.mxu0 0.0
      %1402 = vmatpush1.msra.mxu0 %v1352
      %1403 = vmatprep.subr.mxu0 0.0
      %1404 = vmatpush2.msra.mxu0 0.0
      %1405 = vmatprep.subr.mxu0 0.0
      %1406 = vmatpush2.msra.mxu0 0.0
      %1407 = vmatprep.subr.mxu0 0.0
      %1408 = vmatpush2.msra.mxu0 0.0
      %1409 = vmatprep.subr.mxu0 0.0
      %1410 = vmatpush2.msra.mxu0 0.0
      %1411 = vmatprep.subr.mxu0 0.0
      %1412 = vmatpush2.msra.mxu0 0.0
      %1413 = vmatprep.subr.mxu0 0.0
      %1414 = vmatpush2.msra.mxu0 0.0
      %1415 = vmatprep.subr.mxu0 0.0
      %1416 = vmatpush2.msra.mxu0 0.0
      %1417 = vmatprep.subr.mxu0 0.0
      %1418 = vmatpush2.msra.mxu0 0.0
      %1419 = vmatprep.subr.mxu0 0.0
      %1420 = vmatpush2.msra.mxu0 0.0
      %1421 = vmatprep.subr.mxu0 0.0
      %1422 = vmatpush2.msra.mxu0 0.0
      %1423 = vmatprep.subr.mxu0 0.0
      %1424 = vmatpush2.msra.mxu0 0.0
      %1425 = vmatprep.subr.mxu0 0.0
      %1426 = vmatpush2.msra.mxu0 0.0
      %1427 = vmatprep.subr.mxu0 0.0
      %1428 = vmatpush2.msra.mxu0 0.0
      %1429 = vmatprep.subr.mxu0 0.0
      %1430 = vmatpush2.msra.mxu0 0.0
      %1431 = vmatprep.subr.mxu0 0.0
      %1432 = vmatpush2.msra.mxu0 0.0
      %1433 = vmatprep.subr.mxu0 0.0
      %1434 = vmatpush2.msra.mxu0 0.0
      %1435 = vmatprep.mubr.f32.mxu0 0.0
      %1436 = vmatmul.mubr.f32.gmra.mxu0 %v1369
      %v1437 = vpop.f32.mrf.mxu0
      %v1438 = vadd.f32 %v1365, %v1437
      %v1439 = vpop.f32.mrf.mxu0
      %1440 = vdwg.mxu0
      %vm1441 = vcmask 31744
      %1442 = vst.msk [vmem:[%s271] sm:$0xff] %vm1441, %v1438
      %p1443 = scmp.lt.s32.totalorder %s17, 1
      %s1444 = scalar_select %p1443, %s17, 1
      %s1445 = smul.addr %s1444, 8
      %s1446 = scalar_lea.vmem %s6, %s1445
      // Predicated region
      $region45: #{tpu_custom_call.1} parent=43 // pred_check
        %p1447 = pneg %p171
      $region46: #{tpu_custom_call.1} parent=43 // pred_check_branch
        %1449 = sbr.rel (%p1447) target = $region48
      $region47: #{tpu_custom_call.1} parent=43 // pred_region
        _
      $region48: #{tpu_custom_call.1} parent=43 // pred_fallthru
        _
    $region44: #{tpu_custom_call.1} parent=5 // pred_fallthru
      _
    %p1450 = scmp.le.s32.totalorder 2, %s12
    // Predicated region
    $region49: #{tpu_custom_call.1} parent=5 // pred_check
      %p1451 = pneg %p1450
    $region50: #{tpu_custom_call.1} parent=5 // pred_check_branch
      %1453 = sbr.rel (%p1451) target = $region52
    $region51: #{tpu_custom_call.1} parent=5 // pred_region
      %s1454 = ssub.s32 %s12, 2
      // Predicated region
      $region53: #{tpu_custom_call.1} parent=51 // pred_check
        %p1455 = pneg %p177
      $region54: #{tpu_custom_call.1} parent=51 // pred_check_branch
        %1457 = sbr.rel (%p1455) target = $region56
      $region55: #{tpu_custom_call.1} parent=51 // pred_region
        %p1458 = scmp.lt.s32.totalorder %s18, 1
        %s1459 = scalar_select %p1458, %s18, 1
        %s1460 = smul.addr %s1459, 8
        %s1461 = scalar_lea.vmem %s6, %s1460
      $region56: #{tpu_custom_call.1} parent=51 // pred_fallthru
        _
    $region52: #{tpu_custom_call.1} parent=5 // pred_fallthru
      _
  $region6: #{tpu_custom_call.1} parent=0 // loop_footer
    %s16 = sadd.s32 1, %s12
  $region7: #{tpu_custom_call.1} parent=0 // loop_footer_branch
    %11 = sbr.rel target = $region3
  $region8: #{tpu_custom_call.1} parent=0 // loop_exit
    _

</llo_original>
